<compile_context>
chip_gen: v7x
topology: tpu7x:2x2x1
jax: 0.10.0
libtpu: 0.0.40
codegen_flags: <defaults>
</compile_context>

<pallas_src>
import functools

import jax
import jax.numpy as jnp
import numpy as np
from jax.experimental import pallas as pl
from jax.experimental.pallas import tpu as pltpu

LANES = 128
MAX_TILE_ROWS = 8192          # 4 MiB f32 per input block
VMEM_LIMIT_BYTES = 32 * 1024 * 1024   # safe on v5e/v6e/v7x, keeps 2x buffering


def _mrae_kernel(o_ref, l_ref, out_ref, *, rows, tile_rows, tiles_per_core):
    """Accumulate sum(|o - l| * 1/where(l==0,1e-8,l)) into a per-core (8,128) acc."""
    c = pl.program_id(0)   # core / outer split
    i = pl.program_id(1)   # tile index within this core's range

    @pl.when(i == 0)
    def _():
        out_ref[...] = jnp.zeros_like(out_ref)

    o = o_ref[...].astype(jnp.float32)
    l = l_ref[...].astype(jnp.float32)
    denom = jnp.where(l == 0.0, jnp.float32(1e-8), l)
    # EUP reciprocal instead of a VALU divide (the EUP slot is otherwise idle).
    err = jnp.abs(o - l) * pl.reciprocal(denom, approx=False)

    def _reduce(x):
        # Two interleaved partial-sum streams -> independent add chains.
        if tile_rows >= 16 and tile_rows % 16 == 0:
            e = x.reshape(2, tile_rows // 16, 8, LANES)
            return e[0].sum(axis=0) + e[1].sum(axis=0)
        return x.reshape(tile_rows // 8, 8, LANES).sum(axis=0)

    tile_idx = c * tiles_per_core + i
    row0 = tile_idx * tile_rows
    full_tile = row0 + tile_rows <= rows   # no masking needed on this tile

    @pl.when(full_tile)
    def _():
        out_ref[...] += _reduce(err)

    @pl.when(jnp.logical_not(full_tile))
    def _():
        # Runs for at most one ragged tile (and one clamped overshoot tile) per
        # core, so the iota/select cost is irrelevant.  Garbage (even NaN/inf)
        # in masked rows is forced to exactly 0 by the select.
        row_ids = row0 + jax.lax.broadcasted_iota(jnp.int32, (tile_rows, LANES), 0)
        masked = jnp.where(row_ids < rows, err, jnp.float32(0.0))
        out_ref[...] += _reduce(masked)


def _sublane_granularity(dtype):
    return {4: 8, 2: 16, 1: 32}.get(jnp.dtype(dtype).itemsize, 8)


def mrae_loss(outputs, label):
    assert outputs.shape == label.shape
    n_elems = int(outputs.size)

    flat_o = outputs.reshape(-1)   # reshape only: no copy, native dtype
    flat_l = label.reshape(-1)

    rem = n_elems % LANES
    if rem:
        # Only when numel is not a multiple of 128 (rare for NCHW images).
        # Zero padding contributes |0-0|/1e-8 == 0 to the sum (and is also
        # inside the masked region anyway).
        pad = LANES - rem
        flat_o = jnp.pad(flat_o, (0, pad))
        flat_l = jnp.pad(flat_l, (0, pad))

    rows = flat_o.size // LANES
    o2 = flat_o.reshape(rows, LANES)
    l2 = flat_l.reshape(rows, LANES)

    # Lane-dense tiles, rounded to the dtype's sublane granularity.
    gran = max(_sublane_granularity(outputs.dtype), _sublane_granularity(label.dtype))
    tile_rows = min(MAX_TILE_ROWS, ((rows + gran - 1) // gran) * gran)
    num_tiles = pl.cdiv(rows, tile_rows)

    # Leading "parallel" axis for megacore (v7x); only enabled when it cannot
    # waste bandwidth on single-core chips (even split, or overshoot <= ~6%).
    # TODO(synk): evaluate pltpu.CORE_PARALLEL on v7x once verified in the
    # Mosaic dump that plain "parallel" does not already shard across the 2 TCs.
    if num_tiles >= 2 and (num_tiles % 2 == 0 or num_tiles >= 16):
        num_cores = 2
    else:
        num_cores = 1
    tiles_per_core = pl.cdiv(num_tiles, num_cores)

    def in_map(c, i):
        t = c * tiles_per_core + i
        # Clamp so we never issue a fully out-of-bounds block DMA; the kernel's
        # row mask (based on the *unclamped* logical index) zeroes the
        # contribution of the overshoot tile.
        return (jnp.minimum(t, num_tiles - 1), 0)

    kernel = functools.partial(
        _mrae_kernel,
        rows=rows,
        tile_rows=tile_rows,
        tiles_per_core=tiles_per_core,
    )

    partials = pl.pallas_call(
        kernel,
        out_shape=jax.ShapeDtypeStruct((num_cores, 8, LANES), jnp.float32),
        grid_spec=pltpu.PrefetchScalarGridSpec(
            num_scalar_prefetch=0,
            grid=(num_cores, tiles_per_core),
            in_specs=[
                pl.BlockSpec((tile_rows, LANES), in_map),
                pl.BlockSpec((tile_rows, LANES), in_map),
            ],
            out_specs=pl.BlockSpec((None, 8, LANES), lambda c, i: (c, 0, 0)),
        ),
        compiler_params=pltpu.CompilerParams(
            dimension_semantics=("parallel", "arbitrary"),
            vmem_limit_bytes=VMEM_LIMIT_BYTES),
    )(o2, l2)

    total = jnp.sum(partials, dtype=jnp.float32)
    return (total / jnp.float32(n_elems)).astype(outputs.dtype)


def _mrae_ref_f64(outputs, label):
    """Host-side float64 reference (order-independent, matches PyTorch math)."""
    o = np.asarray(outputs, dtype=np.float64)
    l = np.asarray(label, dtype=np.float64)
    denom = np.where(l == 0.0, 1e-8, l)
    return float(np.mean(np.abs(o - l) / denom))


if __name__ == "__main__":
    key = jax.random.PRNGKey(0)
    k1, k2 = jax.random.split(key)

    # Small NCHW-like inputs.
    shape = (2, 4, 16, 16)
    outputs = jax.random.uniform(k1, shape, jnp.float32, 0.0, 1.0)
    label = jax.random.uniform(k2, shape, jnp.float32, 0.0, 1.0)

    # Case 1: no zero labels (tight tolerance).
    got1 = float(jax.block_until_ready(mrae_loss(outputs, label)))
    want1 = _mrae_ref_f64(outputs, label)
    rel1 = abs(got1 - want1) / max(abs(want1), 1e-12)
    assert np.isfinite(got1) and rel1 < 1e-5, (got1, want1, rel1)

    # Case 2: inject exact zeros to exercise the label==0 path (terms of
    # magnitude ~1e8; compare against float64 with an f32-appropriate rtol).
    label_z = label.at[0, 0, 0, :4].set(0.0)
    got2 = float(jax.block_until_ready(mrae_loss(outputs, label_z)))
    want2 = _mrae_ref_f64(outputs, label_z)
    rel2 = abs(got2 - want2) / max(abs(want2), 1e-12)
    assert np.isfinite(got2) and rel2 < 1e-4, (got2, want2, rel2)

    print("KERNEL_OK")
</pallas_src>

<mosaic_0001>
module attributes {stable_mosaic.version = 11 : i64} {
  func.func @_mrae_kernel(%arg0: i32, %arg1: i32, %arg2: memref<16x128xf32, #tpu.memory_space<vmem>>, %arg3: memref<16x128xf32, #tpu.memory_space<vmem>>, %arg4: memref<1x8x128xf32, #tpu.memory_space<vmem>>) attributes {dimension_semantics = [#tpu.dimension_semantics<parallel>, #tpu.dimension_semantics<arbitrary>], iteration_bounds = array<i64: 1, 1>, scalar_prefetch = 0 : i64, scratch_operands = 0 : i64, tpu.core_type = #tpu.core_type<tc>, window_params = [{transform_indices = @transform_0, window_bounds = array<i64: 16, 128>}, {transform_indices = @transform_1, window_bounds = array<i64: 16, 128>}, {transform_indices = @transform_2, window_bounds = array<i64: 1, 8, 128>}]} {
    %c0_i32 = arith.constant 0 : i32
    %0 = arith.cmpi eq, %arg1, %c0_i32 : i32
    %1 = arith.extui %0 : i1 to i32
    %c0_i32_0 = arith.constant 0 : i32
    %2 = arith.cmpi ne, %1, %c0_i32_0 : i32
    scf.if %2 {
      %cst_9 = arith.constant 0.000000e+00 : f32
      %23 = vector.broadcast %cst_9 : f32 to vector<8x128xf32>
      %c0_10 = arith.constant 0 : index
      %c0_11 = arith.constant 0 : index
      %c0_12 = arith.constant 0 : index
      %24 = vector.load %arg4[%c0_10, %c0_11, %c0_12] : memref<1x8x128xf32, #tpu.memory_space<vmem>>, vector<1x8x128xf32>
      %25 = vector.shape_cast %24 : vector<1x8x128xf32> to vector<8x128xf32>
      %26 = vector.shape_cast %23 : vector<8x128xf32> to vector<1x8x128xf32>
      tpu.vector_store %arg4[%c0_10, %c0_11, %c0_12], %26 {strides = array<i32>} : memref<1x8x128xf32, #tpu.memory_space<vmem>>, vector<1x8x128xf32>,
    } else {
    }
    %c0 = arith.constant 0 : index
    %c0_1 = arith.constant 0 : index
    %3 = vector.load %arg2[%c0, %c0_1] : memref<16x128xf32, #tpu.memory_space<vmem>>, vector<16x128xf32>
    %c0_2 = arith.constant 0 : index
    %c0_3 = arith.constant 0 : index
    %4 = vector.load %arg3[%c0_2, %c0_3] : memref<16x128xf32, #tpu.memory_space<vmem>>, vector<16x128xf32>
    %cst = arith.constant 0.000000e+00 : f32
    %5 = vector.broadcast %cst : f32 to vector<16x128xf32>
    %6 = arith.cmpf oeq, %4, %5 : vector<16x128xf32>
    %cst_4 = arith.constant 9.99999993E-9 : f32
    %7 = vector.broadcast %cst_4 : f32 to vector<16x128xf32>
    %8 = arith.select %6, %7, %4 : vector<16x128xi1>, vector<16x128xf32>
    %9 = arith.subf %3, %4 : vector<16x128xf32>
    %10 = math.absf %9 : vector<16x128xf32>
    %11 = tpu.reciprocal %8 : vector<16x128xf32> -> vector<16x128xf32>
    %12 = arith.mulf %10, %11 : vector<16x128xf32>
    %c1_i32 = arith.constant 1 : i32
    %13 = arith.muli %arg0, %c1_i32 : i32
    %14 = arith.addi %13, %arg1 : i32
    %c16_i32 = arith.constant 16 : i32
    %15 = arith.muli %14, %c16_i32 : i32
    %c16_i32_5 = arith.constant 16 : i32
    %16 = arith.addi %15, %c16_i32_5 : i32
    %c16_i32_6 = arith.constant 16 : i32
    %17 = arith.cmpi sle, %16, %c16_i32_6 : i32
    %18 = arith.extui %17 : i1 to i32
    %c0_i32_7 = arith.constant 0 : i32
    %19 = arith.cmpi ne, %18, %c0_i32_7 : i32
    scf.if %19 {
      %c0_9 = arith.constant 0 : index
      %c0_10 = arith.constant 0 : index
      %c0_11 = arith.constant 0 : index
      %23 = vector.load %arg4[%c0_9, %c0_10, %c0_11] : memref<1x8x128xf32, #tpu.memory_space<vmem>>, vector<1x8x128xf32>
      %24 = vector.shape_cast %23 : vector<1x8x128xf32> to vector<8x128xf32>
      %25 = vector.shape_cast %12 : vector<16x128xf32> to vector<2x1x8x128xf32>
      %26 = vector.extract_strided_slice %25 {offsets = [0, 0, 0, 0], sizes = [1, 1, 8, 128], strides = [1, 1, 1, 1]} : vector<2x1x8x128xf32> to vector<1x1x8x128xf32>
      %27 = vector.shape_cast %26 : vector<1x1x8x128xf32> to vector<1x8x128xf32>
      %cst_12 = arith.constant dense<0.000000e+00> : vector<8x128xf32>
      %28 = vector.multi_reduction <add>, %27, %cst_12 [0] : vector<1x8x128xf32> to vector<8x128xf32>
      %29 = vector.extract_strided_slice %25 {offsets = [1, 0, 0, 0], sizes = [1, 1, 8, 128], strides = [1, 1, 1, 1]} : vector<2x1x8x128xf32> to vector<1x1x8x128xf32>
      %30 = vector.shape_cast %29 : vector<1x1x8x128xf32> to vector<1x8x128xf32>
      %cst_13 = arith.constant dense<0.000000e+00> : vector<8x128xf32>
      %31 = vector.multi_reduction <add>, %30, %cst_13 [0] : vector<1x8x128xf32> to vector<8x128xf32>
      %32 = arith.addf %28, %31 : vector<8x128xf32>
      %33 = arith.addf %24, %32 : vector<8x128xf32>
      %c0_14 = arith.constant 0 : index
      %c0_15 = arith.constant 0 : index
      %c0_16 = arith.constant 0 : index
      %34 = vector.load %arg4[%c0_14, %c0_15, %c0_16] : memref<1x8x128xf32, #tpu.memory_space<vmem>>, vector<1x8x128xf32>
      %35 = vector.shape_cast %34 : vector<1x8x128xf32> to vector<8x128xf32>
      %36 = vector.shape_cast %33 : vector<8x128xf32> to vector<1x8x128xf32>
      tpu.vector_store %arg4[%c0_14, %c0_15, %c0_16], %36 {strides = array<i32>} : memref<1x8x128xf32, #tpu.memory_space<vmem>>, vector<1x8x128xf32>,
    } else {
    }
    %true = arith.constant true
    %20 = arith.xori %17, %true : i1
    %21 = arith.extui %20 : i1 to i32
    %c0_i32_8 = arith.constant 0 : i32
    %22 = arith.cmpi ne, %21, %c0_i32_8 : i32
    scf.if %22 {
      %23 = tpu.iota {dimensions = array<i32: 0>} : vector<16x128xi32>
      %24 = vector.broadcast %15 : i32 to vector<16x128xi32>
      %25 = arith.addi %24, %23 : vector<16x128xi32>
      %c16_i32_9 = arith.constant 16 : i32
      %26 = vector.broadcast %c16_i32_9 : i32 to vector<16x128xi32>
      %27 = arith.cmpi slt, %25, %26 : vector<16x128xi32>
      %cst_10 = arith.constant 0.000000e+00 : f32
      %28 = vector.broadcast %cst_10 : f32 to vector<16x128xf32>
      %29 = arith.select %27, %12, %28 : vector<16x128xi1>, vector<16x128xf32>
      %c0_11 = arith.constant 0 : index
      %c0_12 = arith.constant 0 : index
      %c0_13 = arith.constant 0 : index
      %30 = vector.load %arg4[%c0_11, %c0_12, %c0_13] : memref<1x8x128xf32, #tpu.memory_space<vmem>>, vector<1x8x128xf32>
      %31 = vector.shape_cast %30 : vector<1x8x128xf32> to vector<8x128xf32>
      %32 = vector.shape_cast %29 : vector<16x128xf32> to vector<2x1x8x128xf32>
      %33 = vector.extract_strided_slice %32 {offsets = [0, 0, 0, 0], sizes = [1, 1, 8, 128], strides = [1, 1, 1, 1]} : vector<2x1x8x128xf32> to vector<1x1x8x128xf32>
      %34 = vector.shape_cast %33 : vector<1x1x8x128xf32> to vector<1x8x128xf32>
      %cst_14 = arith.constant dense<0.000000e+00> : vector<8x128xf32>
      %35 = vector.multi_reduction <add>, %34, %cst_14 [0] : vector<1x8x128xf32> to vector<8x128xf32>
      %36 = vector.extract_strided_slice %32 {offsets = [1, 0, 0, 0], sizes = [1, 1, 8, 128], strides = [1, 1, 1, 1]} : vector<2x1x8x128xf32> to vector<1x1x8x128xf32>
      %37 = vector.shape_cast %36 : vector<1x1x8x128xf32> to vector<1x8x128xf32>
      %cst_15 = arith.constant dense<0.000000e+00> : vector<8x128xf32>
      %38 = vector.multi_reduction <add>, %37, %cst_15 [0] : vector<1x8x128xf32> to vector<8x128xf32>
      %39 = arith.addf %35, %38 : vector<8x128xf32>
      %40 = arith.addf %31, %39 : vector<8x128xf32>
      %c0_16 = arith.constant 0 : index
      %c0_17 = arith.constant 0 : index
      %c0_18 = arith.constant 0 : index
      %41 = vector.load %arg4[%c0_16, %c0_17, %c0_18] : memref<1x8x128xf32, #tpu.memory_space<vmem>>, vector<1x8x128xf32>
      %42 = vector.shape_cast %41 : vector<1x8x128xf32> to vector<8x128xf32>
      %43 = vector.shape_cast %40 : vector<8x128xf32> to vector<1x8x128xf32>
      tpu.vector_store %arg4[%c0_16, %c0_17, %c0_18], %43 {strides = array<i32>} : memref<1x8x128xf32, #tpu.memory_space<vmem>>, vector<1x8x128xf32>,
    } else {
    }
    return
  }
  func.func @transform_0(%arg0: i32, %arg1: i32) -> (i32, i32) {
    %c1_i32 = arith.constant 1 : i32
    %0 = arith.muli %arg0, %c1_i32 : i32
    %1 = arith.addi %0, %arg1 : i32
    %c0_i32 = arith.constant 0 : i32
    %2 = arith.minsi %1, %c0_i32 : i32
    %c0_i32_0 = arith.constant 0 : i32
    %c0_i32_1 = arith.constant 0 : i32
    return %2, %c0_i32_0 : i32, i32
  }
  func.func @transform_1(%arg0: i32, %arg1: i32) -> (i32, i32) {
    %c1_i32 = arith.constant 1 : i32
    %0 = arith.muli %arg0, %c1_i32 : i32
    %1 = arith.addi %0, %arg1 : i32
    %c0_i32 = arith.constant 0 : i32
    %2 = arith.minsi %1, %c0_i32 : i32
    %c0_i32_0 = arith.constant 0 : i32
    %c0_i32_1 = arith.constant 0 : i32
    return %2, %c0_i32_0 : i32, i32
  }
  func.func @transform_2(%arg0: i32, %arg1: i32) -> (i32, i32, i32) {
    %c0_i32 = arith.constant 0 : i32
    %c0_i32_0 = arith.constant 0 : i32
    %c0_i32_1 = arith.constant 0 : i32
    return %arg0, %c0_i32, %c0_i32_0 : i32, i32, i32
  }
}

</mosaic_0001>

<llo_original>
// kernel: tpu_custom_call.1
$region0: #{tpu_custom_call.1}
  #allocation0 [shape = 'u32[]', space=smem, size = 0x4, offset = 0x4, fixed_abs, tag = 'smem constant byte address 0x4 - core index']
  #allocation1 [shape = 'u32[144,128]{1,0:T(1,128)}', space=vmem, size = 0x12000, scoped, tag = 'internal scratch']
  %s0 = inlined_call_operand.hbm [shape: f32[16,128], index: 0, kind: input, shape index: {}]
  %s1 = inlined_call_operand.hbm [shape: f32[16,128], index: 1, kind: input, shape index: {}]
  %s2 = inlined_call_operand.hbm [shape: f32[1,8,128], index: 2, kind: output, shape index: {}]
  %s3 = sld [smem:[#allocation0]]
  $region38: #{tpu_custom_call.1} parent=0
    _
  %s5 = ssub.s32 1, %s3
  %s6 = scalar_select 0, %s5, %s3
  $region1: #{tpu_custom_call.1} parent=0
    #allocation2 [shape = 'u8[8192]{0}', space=vmem, size = 0x2000, scoped, tag = 'input window, operand 0, single buffered']
    #allocation3 [shape = 's32[1]{0}', space=sflag, size = 0x4, scoped, tag = 'scoped memory for tpu_custom_call.1']
    #allocation4 [shape = 's32[1]{0}', space=sflag, size = 0x4, scoped, tag = 'scoped memory for tpu_custom_call.1']
    #allocation5 [shape = 'u8[8192]{0}', space=vmem, size = 0x2000, scoped, tag = 'input window, operand 1, single buffered']
    #allocation6 [shape = 's32[1]{0}', space=sflag, size = 0x4, scoped, tag = 'scoped memory for tpu_custom_call.1']
    #allocation7 [shape = 'u8[4096]{0}', space=vmem, size = 0x1000, scoped, tag = 'output window, operand 0, single buffered']
    %7 = vsyncpa [#allocation3], 0
    %8 = vsyncpa [#allocation6], 0
    %9 = vsyncpa [#allocation4], 0
    // Predicated region
    $region2: #{tpu_custom_call.1} parent=1 // pred_check
      _
    $region3: #{tpu_custom_call.1} parent=1 // pred_check_branch
      %11 = sbr.rel (0) target = $region5
    $region4: #{tpu_custom_call.1} parent=1 // pred_region
      %s12 = sadd.s32 0, 0
      %p13 = scmp.lt.s32.totalorder %s12, 0
      %s14 = scalar_select %p13, %s12, 0
      %s15 = smul.u32 2, %s14
      %s17 = ssub.s32 256, 256
      %18 = vsyncadd [#allocation3], %s17
      %s19 = smul.addr %s15, 128
      %s20 = scalar_lea.hbm %s0, %s19
      %s21 = sshll.u32 [#allocation2], 4
      %s22 = int_to_ptr.vmem [resolvable:$true] %s21
      %27 = dma.hbm_to_vmem [thread:$0]  %s20, 256, %s22, [#allocation3], 128, 128, 8
    $region5: #{tpu_custom_call.1} parent=1 // pred_fallthru
      _
    // Predicated region
    $region6: #{tpu_custom_call.1} parent=1 // pred_check
      _
    $region7: #{tpu_custom_call.1} parent=1 // pred_check_branch
      %29 = sbr.rel (0) target = $region9
    $region8: #{tpu_custom_call.1} parent=1 // pred_region
      %s30 = sadd.s32 0, 0
      %p31 = scmp.lt.s32.totalorder %s30, 0
      %s32 = scalar_select %p31, %s30, 0
      %s33 = smul.u32 2, %s32
      %s35 = ssub.s32 256, 256
      %36 = vsyncadd [#allocation6], %s35
      %s37 = smul.addr %s33, 128
      %s38 = scalar_lea.hbm %s1, %s37
      %s39 = sshll.u32 [#allocation5], 4
      %s40 = int_to_ptr.vmem [resolvable:$true] %s39
      %45 = dma.hbm_to_vmem [thread:$0]  %s38, 256, %s40, [#allocation6], 128, 128, 8
    $region9: #{tpu_custom_call.1} parent=1 // pred_fallthru
      _
    // Predicated region
    $region10: #{tpu_custom_call.1} parent=1 // pred_check
      _
    $region11: #{tpu_custom_call.1} parent=1 // pred_check_branch
      %47 = sbr.rel (0) target = $region13
    $region12: #{tpu_custom_call.1} parent=1 // pred_region
      %48 = dma.done [#allocation3], 256
    $region13: #{tpu_custom_call.1} parent=1 // pred_fallthru
      _
    // Predicated region
    $region14: #{tpu_custom_call.1} parent=1 // pred_check
      _
    $region15: #{tpu_custom_call.1} parent=1 // pred_check_branch
      %50 = sbr.rel (0) target = $region17
    $region16: #{tpu_custom_call.1} parent=1 // pred_region
      %51 = dma.done [#allocation6], 256
    $region17: #{tpu_custom_call.1} parent=1 // pred_fallthru
      _
    %s52 = sadd.s32 0, 0
    %p53 = scmp.lt.s32.totalorder %s52, 0
    %s54 = scalar_select %p53, %s52, 0
    %s55 = smul.u32 2, %s54
    %s56 = sadd.s32 0, 0
    %p57 = scmp.lt.s32.totalorder %s56, 0
    %s58 = scalar_select %p57, %s56, 0
    %s59 = smul.u32 2, %s58
    %p60 = scmp.eq.s32.totalorder 0, 0
    // Predicated region
    $region18: #{tpu_custom_call.1} parent=1 // pred_check
      %p61 = pneg %p60
    $region19: #{tpu_custom_call.1} parent=1 // pred_check_branch
      %63 = sbr.rel (%p61) target = $region21
    $region20: #{tpu_custom_call.1} parent=1 // pred_region
      %64 = vst [vmem:[#allocation7] sm:$0xff] 0.0
    $region21: #{tpu_custom_call.1} parent=1 // pred_fallthru
      _
    %v65 = vld [vmem:[#allocation2] sm:$0xff]
    %v66 = vld [vmem:[#allocation2 + $0x8] sm:$0xff]
    %v67 = vld [vmem:[#allocation5] sm:$0xff]
    %v68 = vld [vmem:[#allocation5 + $0x8] sm:$0xff]
    %vm69 = vcmp.eq.f32.partialorder %v67, 0.0
    %vm70 = vcmp.eq.f32.partialorder %v68, 0.0
    %v71 = vsel %vm69, 1e-08, %v67
    %v72 = vsel %vm70, 1e-08, %v68
    %v73 = vsub.f32 %v65, %v67
    %v74 = vsub.f32 %v66, %v68
    %v75 = vand.u32 2147483647, %v73
    %v76 = vand.u32 2147483647, %v74
    %v77 = vrcp.pop %v71
    %v78 = vrcp.pop %v72
    %v79 = vmul.f32 %v75, %v77
    %v80 = vmul.f32 %v76, %v78
    %s81 = sadd.s32 0, 0
    %s82 = smul.u32 %s81, 16
    %s83 = sadd.s32 %s82, 16
    %p84 = scmp.le.s32.totalorder %s83, 16
    // Predicated region
    $region22: #{tpu_custom_call.1} parent=1 // pred_check
      %p85 = pneg %p84
    $region23: #{tpu_custom_call.1} parent=1 // pred_check_branch
      %87 = sbr.rel (%p85) target = $region25
    $region24: #{tpu_custom_call.1} parent=1 // pred_region
      %v88 = vld [vmem:[#allocation7] sm:$0xff]
      %v89 = vadd.f32 %v79, 0.0
      %v90 = vadd.f32 %v80, 0.0
      %v91 = vadd.f32 %v89, %v90
      %v92 = vadd.f32 %v88, %v91
      %93 = vst [vmem:[#allocation7] sm:$0xff] %v92
    $region25: #{tpu_custom_call.1} parent=1 // pred_fallthru
      _
    %p94 = scmp.gt.s32.totalorder %s83, 16
    // Predicated region
    $region26: #{tpu_custom_call.1} parent=1 // pred_check
      %p95 = pneg %p94
    $region27: #{tpu_custom_call.1} parent=1 // pred_check_branch
      %97 = sbr.rel (%p95) target = $region29
    $region28: #{tpu_custom_call.1} parent=1 // pred_region
      %v98 = vlaneseq
      %v99 = vshrl.u32 %v98, 7
      %v100 = vadd.s32 %v99, 8
      %v101 = vstv %s82
      %v102 = vadd.s32 %v101, %v99
      %v103 = vadd.s32 %v101, %v100
      %vm104 = vcmp.lt.s32.totalorder %v102, 16
      %vm105 = vcmp.lt.s32.totalorder %v103, 16
      %v106 = vsel %vm104, %v79, 0.0
      %v107 = vsel %vm105, %v80, 0.0
      %v108 = vld [vmem:[#allocation7] sm:$0xff]
      %v109 = vadd.f32 %v106, 0.0
      %v110 = vadd.f32 %v107, 0.0
      %v111 = vadd.f32 %v109, %v110
      %v112 = vadd.f32 %v108, %v111
      %113 = vst [vmem:[#allocation7] sm:$0xff] %v112
    $region29: #{tpu_custom_call.1} parent=1 // pred_fallthru
      _
    // Predicated region
    $region30: #{tpu_custom_call.1} parent=1 // pred_check
      _
    $region31: #{tpu_custom_call.1} parent=1 // pred_check_branch
      %115 = sbr.rel (0) target = $region33
    $region32: #{tpu_custom_call.1} parent=1 // pred_region
      %s117 = ssub.s32 128, 128
      %118 = vsyncadd [#allocation4], %s117
      %s120 = sshll.u32 [#allocation7], 4
      %s121 = int_to_ptr.vmem [resolvable:$true] %s120
      %123 = dma.vmem_to_hbm [thread:$0]  %s121, 128, %s2, [#allocation4]
    $region33: #{tpu_custom_call.1} parent=1 // pred_fallthru
      _
    // Predicated region
    $region34: #{tpu_custom_call.1} parent=1 // pred_check
      _
    $region35: #{tpu_custom_call.1} parent=1 // pred_check_branch
      %125 = sbr.rel (0) target = $region37
    $region36: #{tpu_custom_call.1} parent=1 // pred_region
      %126 = dma.done [#allocation4], 128
    $region37: #{tpu_custom_call.1} parent=1 // pred_fallthru
      _
    %127 = vsyncpa [#allocation3], 1
    %128 = vsyncpa [#allocation6], 1
    %129 = vsyncpa [#allocation4], 1

</llo_original>
